<compile_context>
chip_gen: v6e
topology: v6e:2x2x1
jax: 0.10.0
libtpu: 0.0.40
codegen_flags: <defaults>
</compile_context>

<pallas_src>
import functools

import jax
import jax.numpy as jnp
import numpy as np
from jax import lax
from jax.experimental import pallas as pl
from jax.experimental.pallas import tpu as pltpu

# Scoped-VMEM budget: a cap, not an allocation. 64 MiB unlocks 512-row tiles on
# 128 MiB parts (v5e/v6e) and is still within v7x physical VMEM.
_VMEM_LIMIT = 64 * 1024 * 1024


# ----------------------------------------------------------------------------
# Tiling helpers
# ----------------------------------------------------------------------------
def _row_tile(m, cap=512):
    """Largest multiple-of-8 divisor of m that is <= cap (fallback: m).

    512+ row tiles hit ~85% of HBM roofline on the mem-bound 1x1 kernels and
    amortize the ~0.35 us per-grid-step overhead.
    """
    best = None
    for t in range(8, min(m, cap) + 1, 8):
        if m % t == 0:
            best = t
    return best if best is not None else m


def _h_tile(hout, cap=8):
    """Largest divisor of hout that is <= cap (keeps the f32 accumulator small)."""
    best = 1
    for t in range(1, min(hout, cap) + 1):
        if hout % t == 0:
            best = t
    return best


def _cout_tile(cout, cap=256):
    """Cout tile: full width if it fits under cap, else the largest multiple-of-128
    divisor <= cap (MXU-width tiles; keeps the K2 accumulator off the spill path)."""
    if cout <= cap:
        return cout
    best = cout
    for t in range(128, cap + 1, 128):
        if cout % t == 0:
            best = t
    return best


# ----------------------------------------------------------------------------
# Pallas kernels
# ----------------------------------------------------------------------------
def _pw_bias_relu_kernel(x_ref, w_ref, b_ref, o_ref):
    # x: (TM, Cin) bf16, w: (Cin, Cout) bf16 (BN scale pre-folded), b: (1, Cout) f32
    y = jnp.dot(x_ref[...], w_ref[...], preferred_element_type=jnp.float32)
    y = jnp.maximum(y + b_ref[...], 0.0)          # f32 epilogue (v5e has no bf16 VPU)
    o_ref[...] = y.astype(o_ref.dtype)


def _pw_bias_add_relu_kernel(x_ref, w_ref, b_ref, r_ref, o_ref):
    # Residual branch fused into the epilogue; residual arrives as bf16 and is
    # upcast in-kernel (halves its HBM read + VMEM block).
    y = jnp.dot(x_ref[...], w_ref[...], preferred_element_type=jnp.float32)
    y = y + b_ref[...] + r_ref[...].astype(jnp.float32)
    o_ref[...] = jnp.maximum(y, 0.0).astype(o_ref.dtype)


def _conv3x3_bias_relu_kernel(xp_ref, w_ref, b_ref, o_ref, *, dilation, TH, Wout):
    # xp_ref: (Hp, Wp, Cin) bf16 -- full zero-padded image of batch n (block index
    #         constant across h/c grid axes -> fetched once, kept resident)
    # w_ref : (3, 3, Cin, TC) bf16 (BN scale pre-folded)
    # b_ref : (1, TC) f32
    # o_ref : (1, TH, Wout, TC) bf16, rows [h*TH, h*TH+TH) x cols [c*TC, c*TC+TC)
    Cin = xp_ref.shape[-1]
    TC = w_ref.shape[-1]
    h = pl.program_id(1)
    row0 = h * TH

    # stride == 1 specialization: 9-tap chained accumulation into one (TH*Wout, TC)
    # f32 accumulator sized by the Cout tile (MRB-friendly in-place accumulate).
    acc = jnp.zeros((TH * Wout, TC), jnp.float32)
    for ky in range(3):
        for kx in range(3):
            x0 = kx * dilation
            patch = xp_ref[pl.ds(row0 + ky * dilation, TH), x0:x0 + Wout, :]
            acc = acc + jnp.dot(patch.reshape(TH * Wout, Cin), w_ref[ky, kx],
                                preferred_element_type=jnp.float32)
    y = jnp.maximum(acc + b_ref[...], 0.0)
    o_ref[0] = y.reshape(TH, Wout, TC).astype(o_ref.dtype)


# ----------------------------------------------------------------------------
# Wrappers (pallas_call plumbing)
# ----------------------------------------------------------------------------
def pw_conv_bias_relu(x2d, w, bias, *, residual=None, out_dtype=jnp.bfloat16):
    M, Cin = x2d.shape
    Cout = w.shape[1]
    TM = _row_tile(M)
    b2 = bias.reshape(1, Cout).astype(jnp.float32)

    in_specs = [
        pl.BlockSpec((TM, Cin), lambda i: (i, 0)),
        pl.BlockSpec((Cin, Cout), lambda i: (0, 0)),
        pl.BlockSpec((1, Cout), lambda i: (0, 0)),
    ]
    if residual is None:
        kernel = _pw_bias_relu_kernel
        args = (x2d, w, b2)
    else:
        kernel = _pw_bias_add_relu_kernel
        args = (x2d, w, b2, residual)
        in_specs.append(pl.BlockSpec((TM, Cout), lambda i: (i, 0)))

    return pl.pallas_call(
        kernel,
        out_shape=jax.ShapeDtypeStruct((M, Cout), out_dtype),
        grid=(M // TM,),
        in_specs=in_specs,
        out_specs=pl.BlockSpec((TM, Cout), lambda i: (i, 0)),
        compiler_params=pltpu.CompilerParams(
            dimension_semantics=("parallel",),
            vmem_limit_bytes=_VMEM_LIMIT),
    )(*args)


def conv3x3_bias_relu(x, w, bias, *, dilation, out_dtype=jnp.bfloat16):
    N, H, W, Cin = x.shape
    Cout = w.shape[-1]
    pad = dilation
    Hout, Wout = H, W                      # stride == 1, "same" padding
    Hp, Wp = H + 2 * pad, W + 2 * pad
    TH = _h_tile(Hout, cap=8)
    TC = _cout_tile(Cout, cap=256)
    b2 = bias.reshape(1, Cout).astype(jnp.float32)

    # Pad once in HBM (bf16, narrowest activation). This replaces the previous
    # per-image zero-fill + VMEM->VMEM scratch copy and removes the serializing
    # h==0 carry, so the H axis can be "parallel".
    xp = jnp.pad(x, ((0, 0), (pad, pad), (pad, pad), (0, 0)))

    kernel = functools.partial(_conv3x3_bias_relu_kernel, dilation=dilation,
                               TH=TH, Wout=Wout)
    return pl.pallas_call(
        kernel,
        out_shape=jax.ShapeDtypeStruct((N, Hout, Wout, Cout), out_dtype),
        grid=(N, Hout // TH, Cout // TC),
        in_specs=[
            # same block index for every (h, c) -> fetched once per batch, resident
            pl.BlockSpec((None, Hp, Wp, Cin), lambda n, h, c: (n, 0, 0, 0)),
            # constant-index weight/bias blocks (could use pl.Buffered(1) on v7x to
            # drop the second buffer; left at default for portability)
            pl.BlockSpec((3, 3, Cin, TC), lambda n, h, c: (0, 0, 0, c)),
            pl.BlockSpec((1, TC), lambda n, h, c: (0, c)),
        ],
        out_specs=pl.BlockSpec((1, TH, Wout, TC), lambda n, h, c: (n, h, 0, c)),
        compiler_params=pltpu.CompilerParams(
            dimension_semantics=("parallel", "parallel", "arbitrary"),
            vmem_limit_bytes=_VMEM_LIMIT),
    )(xp, w, b2)


# ----------------------------------------------------------------------------
# Bottleneck forward (glue in plain JAX, hot paths in Pallas)
# ----------------------------------------------------------------------------
def bottleneck_forward(x_nchw, params, *, stride=1, dilation=1, multi_grid=1):
    assert stride == 1, "TODO(synk): strided conv2 / downsample path not implemented"
    # Single fused wrapper pass: NCHW f32 -> NHWC bf16.  This one bf16 array feeds
    # both K1 and the K3 residual (no separate f32 NHWC copy).
    x_bf = jnp.transpose(x_nchw, (0, 2, 3, 1)).astype(jnp.bfloat16)
    N, H, W, Cin = x_bf.shape
    planes = params["w1"].shape[1]
    expansion = 4
    d = dilation * multi_grid

    # Fold BN scale into conv weights (trace time, f32), cast operands to bf16.
    w1 = (params["w1"] * params["s1"][None, :]).astype(jnp.bfloat16)
    w2 = (params["w2"] * params["s2"][None, None, None, :]).astype(jnp.bfloat16)
    w3 = (params["w3"] * params["s3"][None, :]).astype(jnp.bfloat16)
    b1, b2, b3 = params["b1"], params["b2"], params["b3"]

    M = N * H * W

    # K1: conv1 (1x1) + bn1 + relu          -> bf16 intermediate
    o1 = pw_conv_bias_relu(x_bf.reshape(M, Cin), w1, b1)
    o1 = o1.reshape(N, H, W, planes)

    # K2: conv2 (3x3, dilation) + bn2 + relu -> bf16 intermediate
    o2 = conv3x3_bias_relu(o1, w2, b2, dilation=d)          # (N, H, W, planes)

    # K3: conv3 (1x1) + bn3 + residual add + relu (downsample is None -> residual = x)
    o3 = pw_conv_bias_relu(o2.reshape(M, planes), w3, b3,
                           residual=x_bf.reshape(M, planes * expansion),
                           out_dtype=jnp.float32)
    out = o3.reshape(N, H, W, planes * expansion)
    return jnp.transpose(out, (0, 3, 1, 2))                  # NHWC -> NCHW


# ----------------------------------------------------------------------------
# Deterministic parameter construction + pure-JAX reference
# ----------------------------------------------------------------------------
def make_params(key, inplanes, planes, eps=1e-5):
    expansion = 4
    ks = jax.random.split(key, 15)

    def conv_w(k, shape, fan_in):
        return (jax.random.normal(k, shape, jnp.float32) *
                np.sqrt(2.0 / fan_in)).astype(jnp.float32)

    def bn_fold(kg, kb, km, kv, c):
        gamma = 1.0 + 0.1 * jax.random.normal(kg, (c,), jnp.float32)
        beta = 0.1 * jax.random.normal(kb, (c,), jnp.float32)
        rm = 0.1 * jax.random.normal(km, (c,), jnp.float32)
        rv = jnp.abs(1.0 + 0.1 * jax.random.normal(kv, (c,), jnp.float32))
        scale = gamma * lax.rsqrt(rv + eps)
        bias = beta - rm * scale
        return scale, bias

    w1 = conv_w(ks[0], (inplanes, planes), inplanes)                  # (Cin, planes)
    s1, b1 = bn_fold(ks[1], ks[2], ks[3], ks[4], planes)
    w2 = conv_w(ks[5], (3, 3, planes, planes), planes * 9)            # HWIO
    s2, b2 = bn_fold(ks[6], ks[7], ks[8], ks[9], planes)
    w3 = conv_w(ks[10], (planes, planes * expansion), planes)
    s3, b3 = bn_fold(ks[11], ks[12], ks[13], ks[14], planes * expansion)

    return dict(w1=w1, s1=s1, b1=b1, w2=w2, s2=s2, b2=b2, w3=w3, s3=s3, b3=b3)


def bottleneck_reference(x_nchw, params, *, dilation=1, multi_grid=1):
    """Pure-JAX reference mirroring the kernel's bf16-operand / f32-accum numerics
    (including the bf16 residual)."""
    d = dilation * multi_grid
    f32, bf16 = jnp.float32, jnp.bfloat16
    x_bf = jnp.transpose(x_nchw, (0, 2, 3, 1)).astype(bf16)

    w1 = (params["w1"] * params["s1"][None, :]).astype(bf16)
    w2 = (params["w2"] * params["s2"][None, None, None, :]).astype(bf16)
    w3 = (params["w3"] * params["s3"][None, :]).astype(bf16)

    o = jnp.einsum("nhwc,cd->nhwd", x_bf, w1, preferred_element_type=f32)
    o = jnp.maximum(o + params["b1"], 0.0).astype(bf16)
    o = lax.conv_general_dilated(
        o, w2, window_strides=(1, 1), padding=((d, d), (d, d)),
        rhs_dilation=(d, d), dimension_numbers=("NHWC", "HWIO", "NHWC"),
        preferred_element_type=f32)
    o = jnp.maximum(o + params["b2"], 0.0).astype(bf16)
    o = jnp.einsum("nhwc,cd->nhwd", o, w3, preferred_element_type=f32)
    o = jnp.maximum(o + params["b3"] + x_bf.astype(f32), 0.0)
    return jnp.transpose(o, (0, 3, 1, 2))


if __name__ == "__main__":
    key = jax.random.PRNGKey(0)
    k_x, k_p = jax.random.split(key)

    planes = 4
    inplanes = planes * 4      # 16, so downsample=None residual add is valid
    N, H, W = 2, 16, 16

    x = jax.random.normal(k_x, (N, inplanes, H, W), jnp.float32)
    params = make_params(k_p, inplanes, planes)

    out = jax.block_until_ready(
        bottleneck_forward(x, params, stride=1, dilation=1, multi_grid=1))
    ref = jax.block_until_ready(bottleneck_reference(x, params))

    np.testing.assert_allclose(np.asarray(out, np.float32),
                               np.asarray(ref, np.float32),
                               rtol=1e-2, atol=1e-2)
    print("KERNEL_OK")
</pallas_src>

<mosaic_0001>
module attributes {stable_mosaic.version = 11 : i64} {
  func.func @_pw_bias_relu_kernel(%arg0: i32, %arg1: memref<512x16xbf16, #tpu.memory_space<vmem>>, %arg2: memref<16x4xbf16, #tpu.memory_space<vmem>>, %arg3: memref<1x4xf32, #tpu.memory_space<vmem>>, %arg4: memref<512x4xbf16, #tpu.memory_space<vmem>>) attributes {dimension_semantics = [#tpu.dimension_semantics<parallel>], iteration_bounds = array<i64: 1>, scalar_prefetch = 0 : i64, scratch_operands = 0 : i64, tpu.core_type = #tpu.core_type<tc>, window_params = [{transform_indices = @transform_0, window_bounds = array<i64: 512, 16>}, {pipeline_mode = #tpu.pipeline_mode<synchronous>, transform_indices = @transform_1, window_bounds = array<i64: 16, 4>}, {pipeline_mode = #tpu.pipeline_mode<synchronous>, transform_indices = @transform_2, window_bounds = array<i64: 1, 4>}, {transform_indices = @transform_3, window_bounds = array<i64: 512, 4>}]} {
    %c0 = arith.constant 0 : index
    %c0_0 = arith.constant 0 : index
    %0 = vector.load %arg1[%c0, %c0_0] : memref<512x16xbf16, #tpu.memory_space<vmem>>, vector<512x16xbf16>
    %c0_1 = arith.constant 0 : index
    %c0_2 = arith.constant 0 : index
    %1 = vector.load %arg2[%c0_1, %c0_2] : memref<16x4xbf16, #tpu.memory_space<vmem>>, vector<16x4xbf16>
    %cst = arith.constant dense<0.000000e+00> : vector<512x4xf32>
    %2 = tpu.matmul %0, %1, %cst {dimension_numbers = #tpu.dot_dimension_numbers<[1], [0], [0], [1], [0, 0, 1, 1], [], []>} : vector<512x16xbf16>, vector<16x4xbf16>, vector<512x4xf32> -> vector<512x4xf32>
    %c0_3 = arith.constant 0 : index
    %c0_4 = arith.constant 0 : index
    %3 = vector.load %arg3[%c0_3, %c0_4] : memref<1x4xf32, #tpu.memory_space<vmem>>, vector<1x4xf32>
    %4 = vector.broadcast %3 : vector<1x4xf32> to vector<512x4xf32>
    %5 = arith.addf %2, %4 : vector<512x4xf32>
    %cst_5 = arith.constant 0.000000e+00 : f32
    %6 = vector.broadcast %cst_5 : f32 to vector<512x4xf32>
    %7 = arith.maximumf %5, %6 : vector<512x4xf32>
    %8 = arith.truncf %7 : vector<512x4xf32> to vector<512x4xbf16>
    %c0_6 = arith.constant 0 : index
    %c0_7 = arith.constant 0 : index
    %9 = vector.load %arg4[%c0_6, %c0_7] : memref<512x4xbf16, #tpu.memory_space<vmem>>, vector<512x4xbf16>
    tpu.vector_store %arg4[%c0_6, %c0_7], %8 {strides = array<i32>} : memref<512x4xbf16, #tpu.memory_space<vmem>>, vector<512x4xbf16>,
    return
  }
  func.func @transform_0(%arg0: i32) -> (i32, i32) {
    %c0_i32 = arith.constant 0 : i32
    %c0_i32_0 = arith.constant 0 : i32
    return %arg0, %c0_i32 : i32, i32
  }
  func.func @transform_1(%arg0: i32) -> (i32, i32) {
    %c0_i32 = arith.constant 0 : i32
    %c0_i32_0 = arith.constant 0 : i32
    %c0_i32_1 = arith.constant 0 : i32
    return %c0_i32, %c0_i32_0 : i32, i32
  }
  func.func @transform_2(%arg0: i32) -> (i32, i32) {
    %c0_i32 = arith.constant 0 : i32
    %c0_i32_0 = arith.constant 0 : i32
    %c0_i32_1 = arith.constant 0 : i32
    return %c0_i32, %c0_i32_0 : i32, i32
  }
  func.func @transform_3(%arg0: i32) -> (i32, i32) {
    %c0_i32 = arith.constant 0 : i32
    %c0_i32_0 = arith.constant 0 : i32
    return %arg0, %c0_i32 : i32, i32
  }
}

</mosaic_0001>

<llo_original>
// kernel: tpu_custom_call.1
$region0: #{tpu_custom_call.1}
  #allocation0 [shape = 'u32[]', space=smem, size = 0x4, offset = 0x4, fixed_abs, tag = 'smem constant byte address 0x4 - core index']
  #allocation1 [shape = 'u32[144,128]{1,0:T(1,128)}', space=vmem, size = 0x12000, scoped, tag = 'internal scratch']
  %s0 = inlined_call_operand.vmem [shape: bf16[512,16], index: 0, kind: input, shape index: {}]
  %s1 = inlined_call_operand.vmem [shape: bf16[16,4], index: 1, kind: input, shape index: {}]
  %s2 = inlined_call_operand.vmem [shape: f32[1,4], index: 2, kind: input, shape index: {}]
  %s3 = inlined_call_operand.vmem [shape: bf16[512,4], index: 3, kind: output, shape index: {}]
  %s4 = sld [smem:[#allocation0]]
  $region22: #{tpu_custom_call.1} parent=0
    _
  %s6 = ssub.s32 1, %s4
  %s7 = scalar_select 0, %s6, %s4
  // Predicated region
  $region2: #{tpu_custom_call.1} parent=0 // pred_check
    _
  $region3: #{tpu_custom_call.1} parent=0 // pred_check_branch
    %9 = sbr.rel (0) target = $region5
  $region4: #{tpu_custom_call.1} parent=0 // pred_region
    _
  $region5: #{tpu_custom_call.1} parent=0 // pred_fallthru
    _
  // Predicated region
  $region6: #{tpu_custom_call.1} parent=0 // pred_check
    _
  $region7: #{tpu_custom_call.1} parent=0 // pred_check_branch
    %11 = sbr.rel (0) target = $region9
  $region8: #{tpu_custom_call.1} parent=0 // pred_region
    _
  $region9: #{tpu_custom_call.1} parent=0 // pred_fallthru
    _
  // Predicated region
  $region10: #{tpu_custom_call.1} parent=0 // pred_check
    _
  $region11: #{tpu_custom_call.1} parent=0 // pred_check_branch
    %13 = sbr.rel (0) target = $region13
  $region12: #{tpu_custom_call.1} parent=0 // pred_region
    _
  $region13: #{tpu_custom_call.1} parent=0 // pred_fallthru
    _
  %v15 = vld [vmem:[%s0] sm:$0xf]
  %v16 = vld [vmem:[%s0 + $0x4] sm:$0xf]
  %v17 = vld [vmem:[%s0 + $0x8] sm:$0xf]
  %v18 = vld [vmem:[%s0 + $0xc] sm:$0xf]
  %v19 = vld [vmem:[%s0 + $0x10] sm:$0xf]
  %v20 = vld [vmem:[%s0 + $0x14] sm:$0xf]
  %v21 = vld [vmem:[%s0 + $0x18] sm:$0xf]
  %v22 = vld [vmem:[%s0 + $0x1c] sm:$0xf]
  %v23 = vld [vmem:[%s0 + $0x20] sm:$0xf]
  %v24 = vld [vmem:[%s0 + $0x24] sm:$0xf]
  %v25 = vld [vmem:[%s0 + $0x28] sm:$0xf]
  %v26 = vld [vmem:[%s0 + $0x2c] sm:$0xf]
  %v27 = vld [vmem:[%s0 + $0x30] sm:$0xf]
  %v28 = vld [vmem:[%s0 + $0x34] sm:$0xf]
  %v29 = vld [vmem:[%s0 + $0x38] sm:$0xf]
  %v30 = vld [vmem:[%s0 + $0x3c] sm:$0xf]
  %v31 = vld [vmem:[%s0 + $0x40] sm:$0xf]
  %v32 = vld [vmem:[%s0 + $0x44] sm:$0xf]
  %v33 = vld [vmem:[%s0 + $0x48] sm:$0xf]
  %v34 = vld [vmem:[%s0 + $0x4c] sm:$0xf]
  %v35 = vld [vmem:[%s0 + $0x50] sm:$0xf]
  %v36 = vld [vmem:[%s0 + $0x54] sm:$0xf]
  %v37 = vld [vmem:[%s0 + $0x58] sm:$0xf]
  %v38 = vld [vmem:[%s0 + $0x5c] sm:$0xf]
  %v39 = vld [vmem:[%s0 + $0x60] sm:$0xf]
  %v40 = vld [vmem:[%s0 + $0x64] sm:$0xf]
  %v41 = vld [vmem:[%s0 + $0x68] sm:$0xf]
  %v42 = vld [vmem:[%s0 + $0x6c] sm:$0xf]
  %v43 = vld [vmem:[%s0 + $0x70] sm:$0xf]
  %v44 = vld [vmem:[%s0 + $0x74] sm:$0xf]
  %v45 = vld [vmem:[%s0 + $0x78] sm:$0xf]
  %v46 = vld [vmem:[%s0 + $0x7c] sm:$0xf]
  %v47 = vld [vmem:[%s0 + $0x80] sm:$0xf]
  %v48 = vld [vmem:[%s0 + $0x84] sm:$0xf]
  %v49 = vld [vmem:[%s0 + $0x88] sm:$0xf]
  %v50 = vld [vmem:[%s0 + $0x8c] sm:$0xf]
  %v51 = vld [vmem:[%s0 + $0x90] sm:$0xf]
  %v52 = vld [vmem:[%s0 + $0x94] sm:$0xf]
  %v53 = vld [vmem:[%s0 + $0x98] sm:$0xf]
  %v54 = vld [vmem:[%s0 + $0x9c] sm:$0xf]
  %v55 = vld [vmem:[%s0 + $0xa0] sm:$0xf]
  %v56 = vld [vmem:[%s0 + $0xa4] sm:$0xf]
  %v57 = vld [vmem:[%s0 + $0xa8] sm:$0xf]
  %v58 = vld [vmem:[%s0 + $0xac] sm:$0xf]
  %v59 = vld [vmem:[%s0 + $0xb0] sm:$0xf]
  %v60 = vld [vmem:[%s0 + $0xb4] sm:$0xf]
  %v61 = vld [vmem:[%s0 + $0xb8] sm:$0xf]
  %v62 = vld [vmem:[%s0 + $0xbc] sm:$0xf]
  %v63 = vld [vmem:[%s0 + $0xc0] sm:$0xf]
  %v64 = vld [vmem:[%s0 + $0xc4] sm:$0xf]
  %v65 = vld [vmem:[%s0 + $0xc8] sm:$0xf]
  %v66 = vld [vmem:[%s0 + $0xcc] sm:$0xf]
  %v67 = vld [vmem:[%s0 + $0xd0] sm:$0xf]
  %v68 = vld [vmem:[%s0 + $0xd4] sm:$0xf]
  %v69 = vld [vmem:[%s0 + $0xd8] sm:$0xf]
  %v70 = vld [vmem:[%s0 + $0xdc] sm:$0xf]
  %v71 = vld [vmem:[%s0 + $0xe0] sm:$0xf]
  %v72 = vld [vmem:[%s0 + $0xe4] sm:$0xf]
  %v73 = vld [vmem:[%s0 + $0xe8] sm:$0xf]
  %v74 = vld [vmem:[%s0 + $0xec] sm:$0xf]
  %v75 = vld [vmem:[%s0 + $0xf0] sm:$0xf]
  %v76 = vld [vmem:[%s0 + $0xf4] sm:$0xf]
  %v77 = vld [vmem:[%s0 + $0xf8] sm:$0xf]
  %v78 = vld [vmem:[%s0 + $0xfc] sm:$0xf]
  %v79 = vld [vmem:[%s1] sm:$0xf]
  %v80 = vld [vmem:[%s1 + $0x4] sm:$0xf]
  %v81 = vld [vmem:[%s2] sm:$0x1]
  %v83 = vlaneseq
  %v84 = vshrl.u32 %v83, 7
  %v85 = vsub.s32 0, %v84
  %v86 = vrot.slane %v81, %v85
  %v152 = vunpack.c.l.b16 %v15
  %v153 = vunpack.c.l.b16 %v16
  %v154 = vunpack.c.l.b16 %v17
  %v155 = vunpack.c.l.b16 %v18
  %v156 = vunpack.c.l.b16 %v19
  %v157 = vunpack.c.l.b16 %v20
  %v158 = vunpack.c.l.b16 %v21
  %v159 = vunpack.c.l.b16 %v22
  %v160 = vunpack.c.l.b16 %v23
  %v161 = vunpack.c.l.b16 %v24
  %v162 = vunpack.c.l.b16 %v25
  %v163 = vunpack.c.l.b16 %v26
  %v164 = vunpack.c.l.b16 %v27
  %v165 = vunpack.c.l.b16 %v28
  %v166 = vunpack.c.l.b16 %v29
  %v167 = vunpack.c.l.b16 %v30
  %v168 = vunpack.c.l.b16 %v31
  %v169 = vunpack.c.l.b16 %v32
  %v170 = vunpack.c.l.b16 %v33
  %v171 = vunpack.c.l.b16 %v34
  %v172 = vunpack.c.l.b16 %v35
  %v173 = vunpack.c.l.b16 %v36
  %v174 = vunpack.c.l.b16 %v37
  %v175 = vunpack.c.l.b16 %v38
  %v176 = vunpack.c.l.b16 %v39
  %v177 = vunpack.c.l.b16 %v40
  %v178 = vunpack.c.l.b16 %v41
  %v179 = vunpack.c.l.b16 %v42
  %v180 = vunpack.c.l.b16 %v43
  %v181 = vunpack.c.l.b16 %v44
  %v182 = vunpack.c.l.b16 %v45
  %v183 = vunpack.c.l.b16 %v46
  %v184 = vunpack.c.l.b16 %v47
  %v185 = vunpack.c.l.b16 %v48
  %v186 = vunpack.c.l.b16 %v49
  %v187 = vunpack.c.l.b16 %v50
  %v188 = vunpack.c.l.b16 %v51
  %v189 = vunpack.c.l.b16 %v52
  %v190 = vunpack.c.l.b16 %v53
  %v191 = vunpack.c.l.b16 %v54
  %v192 = vunpack.c.l.b16 %v55
  %v193 = vunpack.c.l.b16 %v56
  %v194 = vunpack.c.l.b16 %v57
  %v195 = vunpack.c.l.b16 %v58
  %v196 = vunpack.c.l.b16 %v59
  %v197 = vunpack.c.l.b16 %v60
  %v198 = vunpack.c.l.b16 %v61
  %v199 = vunpack.c.l.b16 %v62
  %v200 = vunpack.c.l.b16 %v63
  %v201 = vunpack.c.l.b16 %v64
  %v202 = vunpack.c.l.b16 %v65
  %v203 = vunpack.c.l.b16 %v66
  %v204 = vunpack.c.l.b16 %v67
  %v205 = vunpack.c.l.b16 %v68
  %v206 = vunpack.c.l.b16 %v69
  %v207 = vunpack.c.l.b16 %v70
  %v208 = vunpack.c.l.b16 %v71
  %v209 = vunpack.c.l.b16 %v72
  %v210 = vunpack.c.l.b16 %v73
  %v211 = vunpack.c.l.b16 %v74
  %v212 = vunpack.c.l.b16 %v75
  %v213 = vunpack.c.l.b16 %v76
  %v214 = vunpack.c.l.b16 %v77
  %v215 = vunpack.c.l.b16 %v78
  %v216 = vpack.c.b16 %v153, %v152
  %v217 = vpack.c.b16 %v155, %v154
  %v218 = vpack.c.b16 %v157, %v156
  %v219 = vpack.c.b16 %v159, %v158
  %v220 = vpack.c.b16 %v161, %v160
  %v221 = vpack.c.b16 %v163, %v162
  %v222 = vpack.c.b16 %v165, %v164
  %v223 = vpack.c.b16 %v167, %v166
  %v224 = vpack.c.b16 %v169, %v168
  %v225 = vpack.c.b16 %v171, %v170
  %v226 = vpack.c.b16 %v173, %v172
  %v227 = vpack.c.b16 %v175, %v174
  %v228 = vpack.c.b16 %v177, %v176
  %v229 = vpack.c.b16 %v179, %v178
  %v230 = vpack.c.b16 %v181, %v180
  %v231 = vpack.c.b16 %v183, %v182
  %v232 = vpack.c.b16 %v185, %v184
  %v233 = vpack.c.b16 %v187, %v186
  %v234 = vpack.c.b16 %v189, %v188
  %v235 = vpack.c.b16 %v191, %v190
  %v236 = vpack.c.b16 %v193, %v192
  %v237 = vpack.c.b16 %v195, %v194
  %v238 = vpack.c.b16 %v197, %v196
  %v239 = vpack.c.b16 %v199, %v198
  %v240 = vpack.c.b16 %v201, %v200
  %v241 = vpack.c.b16 %v203, %v202
  %v242 = vpack.c.b16 %v205, %v204
  %v243 = vpack.c.b16 %v207, %v206
  %v244 = vpack.c.b16 %v209, %v208
  %v245 = vpack.c.b16 %v211, %v210
  %v246 = vpack.c.b16 %v213, %v212
  %v247 = vpack.c.b16 %v215, %v214
  %v250 = vunpack.c.l.b16 %v79
  %v251 = vunpack.c.l.b16 %v80
  %v252 = vpack.c.b16 %v251, %v250
  %vm254 = vcmask 130048
  %v256 = vsel %vm254, %v216, 0
  %v259 = vsel %vm254, %v217, 0
  %v262 = vsel %vm254, %v218, 0
  %v265 = vsel %vm254, %v219, 0
  %v268 = vsel %vm254, %v220, 0
  %v271 = vsel %vm254, %v221, 0
  %v274 = vsel %vm254, %v222, 0
  %v277 = vsel %vm254, %v223, 0
  %v280 = vsel %vm254, %v224, 0
  %v283 = vsel %vm254, %v225, 0
  %v286 = vsel %vm254, %v226, 0
  %v289 = vsel %vm254, %v227, 0
  %v292 = vsel %vm254, %v228, 0
  %v295 = vsel %vm254, %v229, 0
  %v298 = vsel %vm254, %v230, 0
  %v301 = vsel %vm254, %v231, 0
  %v304 = vsel %vm254, %v232, 0
  %v307 = vsel %vm254, %v233, 0
  %v310 = vsel %vm254, %v234, 0
  %v313 = vsel %vm254, %v235, 0
  %v316 = vsel %vm254, %v236, 0
  %v319 = vsel %vm254, %v237, 0
  %v322 = vsel %vm254, %v238, 0
  %v325 = vsel %vm254, %v239, 0
  %v328 = vsel %vm254, %v240, 0
  %v331 = vsel %vm254, %v241, 0
  %v334 = vsel %vm254, %v242, 0
  %v337 = vsel %vm254, %v243, 0
  %v340 = vsel %vm254, %v244, 0
  %v343 = vsel %vm254, %v245, 0
  %v346 = vsel %vm254, %v246, 0
  %v349 = vsel %vm254, %v247, 0
  %351 = vmatprep.subr.bf16.mxu0 0
  %352 = vmatpush1.bf16.msra.mxu0 0
  %353 = vmatprep.subr.bf16.mxu0 0
  %354 = vmatpush1.bf16.msra.mxu0 0
  %355 = vmatprep.subr.bf16.mxu0 0
  %356 = vmatpush1.bf16.msra.mxu0 0
  %357 = vmatprep.subr.bf16.mxu0 0
  %358 = vmatpush1.bf16.msra.mxu0 0
  %359 = vmatprep.subr.bf16.mxu0 0
  %360 = vmatpush1.bf16.msra.mxu0 0
  %361 = vmatprep.subr.bf16.mxu0 0
  %362 = vmatpush1.bf16.msra.mxu0 0
  %363 = vmatprep.subr.bf16.mxu0 0
  %364 = vmatpush1.bf16.msra.mxu0 0
  %365 = vmatprep.subr.bf16.mxu0 0
  %366 = vmatpush1.bf16.msra.mxu0 %v252
  %367 = vmatprep.subr.bf16.mxu0 0
  %368 = vmatpush2.bf16.msra.mxu0 0
  %369 = vmatprep.subr.bf16.mxu0 0
  %370 = vmatpush2.bf16.msra.mxu0 0
  %371 = vmatprep.subr.bf16.mxu0 0
  %372 = vmatpush2.bf16.msra.mxu0 0
  %373 = vmatprep.subr.bf16.mxu0 0
  %374 = vmatpush2.bf16.msra.mxu0 0
  %375 = vmatprep.subr.bf16.mxu0 0
  %376 = vmatpush2.bf16.msra.mxu0 0
  %377 = vmatprep.subr.bf16.mxu0 0
  %378 = vmatpush2.bf16.msra.mxu0 0
  %379 = vmatprep.subr.bf16.mxu0 0
  %380 = vmatpush2.bf16.msra.mxu0 0
  %381 = vmatprep.subr.bf16.mxu0 0
  %382 = vmatpush2.bf16.msra.mxu0 0
  %383 = vmatprep.mubr.bf16.mxu0 0
  %384 = vmatmul.mubr.bf16.gmra.mxu0 %v256
  %v385 = vpop.f32.mrf.mxu0
  %v386 = vadd.f32 %v86, %v385
  %v387 = vpop.f32.mrf.mxu0
  %v388 = vpop.f32.mrf.mxu0
  %v389 = vadd.f32 %v86, %v388
  %v390 = vpop.f32.mrf.mxu0
  %391 = vmatprep.mubr.bf16.mxu0 0
  %392 = vmatmul.mubr.bf16.gmra.mxu0 %v259
  %v393 = vpop.f32.mrf.mxu0
  %v394 = vadd.f32 %v86, %v393
  %v395 = vpop.f32.mrf.mxu0
  %v396 = vpop.f32.mrf.mxu0
  %v397 = vadd.f32 %v86, %v396
  %v398 = vpop.f32.mrf.mxu0
  %399 = vmatprep.mubr.bf16.mxu0 0
  %400 = vmatmul.mubr.bf16.gmra.mxu0 %v262
  %v401 = vpop.f32.mrf.mxu0
  %v402 = vadd.f32 %v86, %v401
  %v403 = vpop.f32.mrf.mxu0
  %v404 = vpop.f32.mrf.mxu0
  %v405 = vadd.f32 %v86, %v404
  %v406 = vpop.f32.mrf.mxu0
  %407 = vmatprep.mubr.bf16.mxu0 0
  %408 = vmatmul.mubr.bf16.gmra.mxu0 %v265
  %v409 = vpop.f32.mrf.mxu0
  %v410 = vadd.f32 %v86, %v409
  %v411 = vpop.f32.mrf.mxu0
  %v412 = vpop.f32.mrf.mxu0
  %v413 = vadd.f32 %v86, %v412
  %v414 = vpop.f32.mrf.mxu0
  %415 = vmatprep.mubr.bf16.mxu0 0
  %416 = vmatmul.mubr.bf16.gmra.mxu0 %v268
  %v417 = vpop.f32.mrf.mxu0
  %v418 = vadd.f32 %v86, %v417
  %v419 = vpop.f32.mrf.mxu0
  %v420 = vpop.f32.mrf.mxu0
  %v421 = vadd.f32 %v86, %v420
  %v422 = vpop.f32.mrf.mxu0
  %423 = vmatprep.mubr.bf16.mxu0 0
  %424 = vmatmul.mubr.bf16.gmra.mxu0 %v271
  %v425 = vpop.f32.mrf.mxu0
  %v426 = vadd.f32 %v86, %v425
  %v427 = vpop.f32.mrf.mxu0
  %v428 = vpop.f32.mrf.mxu0
  %v429 = vadd.f32 %v86, %v428
  %v430 = vpop.f32.mrf.mxu0
  %431 = vmatprep.mubr.bf16.mxu0 0
  %432 = vmatmul.mubr.bf16.gmra.mxu0 %v274
  %v433 = vpop.f32.mrf.mxu0
  %v434 = vadd.f32 %v86, %v433
  %v435 = vpop.f32.mrf.mxu0
  %v436 = vpop.f32.mrf.mxu0
  %v437 = vadd.f32 %v86, %v436
  %v438 = vpop.f32.mrf.mxu0
  %439 = vmatprep.mubr.bf16.mxu0 0
  %440 = vmatmul.mubr.bf16.gmra.mxu0 %v277
  %v441 = vpop.f32.mrf.mxu0
  %v442 = vadd.f32 %v86, %v441
  %v443 = vpop.f32.mrf.mxu0
  %v444 = vpop.f32.mrf.mxu0
  %v445 = vadd.f32 %v86, %v444
  %v446 = vpop.f32.mrf.mxu0
  %447 = vmatprep.mubr.bf16.mxu0 0
  %448 = vmatmul.mubr.bf16.gmra.mxu0 %v280
  %v449 = vpop.f32.mrf.mxu0
  %v450 = vadd.f32 %v86, %v449
  %v451 = vpop.f32.mrf.mxu0
  %v452 = vpop.f32.mrf.mxu0
  %v453 = vadd.f32 %v86, %v452
  %v454 = vpop.f32.mrf.mxu0
  %455 = vmatprep.mubr.bf16.mxu0 0
  %456 = vmatmul.mubr.bf16.gmra.mxu0 %v283
  %v457 = vpop.f32.mrf.mxu0
  %v458 = vadd.f32 %v86, %v457
  %v459 = vpop.f32.mrf.mxu0
  %v460 = vpop.f32.mrf.mxu0
  %v461 = vadd.f32 %v86, %v460
  %v462 = vpop.f32.mrf.mxu0
  %463 = vmatprep.mubr.bf16.mxu0 0
  %464 = vmatmul.mubr.bf16.gmra.mxu0 %v286
  %v465 = vpop.f32.mrf.mxu0
  %v466 = vadd.f32 %v86, %v465
  %v467 = vpop.f32.mrf.mxu0
  %v468 = vpop.f32.mrf.mxu0
  %v469 = vadd.f32 %v86, %v468
  %v470 = vpop.f32.mrf.mxu0
  %471 = vmatprep.mubr.bf16.mxu0 0
  %472 = vmatmul.mubr.bf16.gmra.mxu0 %v289
  %v473 = vpop.f32.mrf.mxu0
  %v474 = vadd.f32 %v86, %v473
  %v475 = vpop.f32.mrf.mxu0
  %v476 = vpop.f32.mrf.mxu0
  %v477 = vadd.f32 %v86, %v476
  %v478 = vpop.f32.mrf.mxu0
  %479 = vmatprep.mubr.bf16.mxu0 0
  %480 = vmatmul.mubr.bf16.gmra.mxu0 %v292
  %v481 = vpop.f32.mrf.mxu0
  %v482 = vadd.f32 %v86, %v481
  %v483 = vpop.f32.mrf.mxu0
  %v484 = vpop.f32.mrf.mxu0
  %v485 = vadd.f32 %v86, %v484
  %v486 = vpop.f32.mrf.mxu0
  %487 = vmatprep.mubr.bf16.mxu0 0
  %488 = vmatmul.mubr.bf16.gmra.mxu0 %v295
  %v489 = vpop.f32.mrf.mxu0
  %v490 = vadd.f32 %v86, %v489
  %v491 = vpop.f32.mrf.mxu0
  %v492 = vpop.f32.mrf.mxu0
  %v493 = vadd.f32 %v86, %v492
  %v494 = vpop.f32.mrf.mxu0
  %495 = vmatprep.mubr.bf16.mxu0 0
  %496 = vmatmul.mubr.bf16.gmra.mxu0 %v298
  %v497 = vpop.f32.mrf.mxu0
  %v498 = vadd.f32 %v86, %v497
  %v499 = vpop.f32.mrf.mxu0
  %v500 = vpop.f32.mrf.mxu0
  %v501 = vadd.f32 %v86, %v500
  %v502 = vpop.f32.mrf.mxu0
  %503 = vmatprep.mubr.bf16.mxu0 0
  %504 = vmatmul.mubr.bf16.gmra.mxu0 %v301
  %v505 = vpop.f32.mrf.mxu0
  %v506 = vadd.f32 %v86, %v505
  %v507 = vpop.f32.mrf.mxu0
  %v508 = vpop.f32.mrf.mxu0
  %v509 = vadd.f32 %v86, %v508
  %v510 = vpop.f32.mrf.mxu0
  %511 = vmatprep.mubr.bf16.mxu0 0
  %512 = vmatmul.mubr.bf16.gmra.mxu0 %v304
  %v513 = vpop.f32.mrf.mxu0
  %v514 = vadd.f32 %v86, %v513
  %v515 = vpop.f32.mrf.mxu0
  %v516 = vpop.f32.mrf.mxu0
  %v517 = vadd.f32 %v86, %v516
  %v518 = vpop.f32.mrf.mxu0
  %519 = vmatprep.mubr.bf16.mxu0 0
  %520 = vmatmul.mubr.bf16.gmra.mxu0 %v307
  %v521 = vpop.f32.mrf.mxu0
  %v522 = vadd.f32 %v86, %v521
  %v523 = vpop.f32.mrf.mxu0
  %v524 = vpop.f32.mrf.mxu0
  %v525 = vadd.f32 %v86, %v524
  %v526 = vpop.f32.mrf.mxu0
  %527 = vmatprep.mubr.bf16.mxu0 0
  %528 = vmatmul.mubr.bf16.gmra.mxu0 %v310
  %v529 = vpop.f32.mrf.mxu0
  %v530 = vadd.f32 %v86, %v529
  %v531 = vpop.f32.mrf.mxu0
  %v532 = vpop.f32.mrf.mxu0
  %v533 = vadd.f32 %v86, %v532
  %v534 = vpop.f32.mrf.mxu0
  %535 = vmatprep.mubr.bf16.mxu0 0
  %536 = vmatmul.mubr.bf16.gmra.mxu0 %v313
  %v537 = vpop.f32.mrf.mxu0
  %v538 = vadd.f32 %v86, %v537
  %v539 = vpop.f32.mrf.mxu0
  %v540 = vpop.f32.mrf.mxu0
  %v541 = vadd.f32 %v86, %v540
  %v542 = vpop.f32.mrf.mxu0
  %543 = vmatprep.mubr.bf16.mxu0 0
  %544 = vmatmul.mubr.bf16.gmra.mxu0 %v316
  %v545 = vpop.f32.mrf.mxu0
  %v546 = vadd.f32 %v86, %v545
  %v547 = vpop.f32.mrf.mxu0
  %v548 = vpop.f32.mrf.mxu0
  %v549 = vadd.f32 %v86, %v548
  %v550 = vpop.f32.mrf.mxu0
  %551 = vmatprep.mubr.bf16.mxu0 0
  %552 = vmatmul.mubr.bf16.gmra.mxu0 %v319
  %v553 = vpop.f32.mrf.mxu0
  %v554 = vadd.f32 %v86, %v553
  %v555 = vpop.f32.mrf.mxu0
  %v556 = vpop.f32.mrf.mxu0
  %v557 = vadd.f32 %v86, %v556
  %v558 = vpop.f32.mrf.mxu0
  %559 = vmatprep.mubr.bf16.mxu0 0
  %560 = vmatmul.mubr.bf16.gmra.mxu0 %v322
  %v561 = vpop.f32.mrf.mxu0
  %v562 = vadd.f32 %v86, %v561
  %v563 = vpop.f32.mrf.mxu0
  %v564 = vpop.f32.mrf.mxu0
  %v565 = vadd.f32 %v86, %v564
  %v566 = vpop.f32.mrf.mxu0
  %567 = vmatprep.mubr.bf16.mxu0 0
  %568 = vmatmul.mubr.bf16.gmra.mxu0 %v325
  %v569 = vpop.f32.mrf.mxu0
  %v570 = vadd.f32 %v86, %v569
  %v571 = vpop.f32.mrf.mxu0
  %v572 = vpop.f32.mrf.mxu0
  %v573 = vadd.f32 %v86, %v572
  %v574 = vpop.f32.mrf.mxu0
  %575 = vmatprep.mubr.bf16.mxu0 0
  %576 = vmatmul.mubr.bf16.gmra.mxu0 %v328
  %v577 = vpop.f32.mrf.mxu0
  %v578 = vadd.f32 %v86, %v577
  %v579 = vpop.f32.mrf.mxu0
  %v580 = vpop.f32.mrf.mxu0
  %v581 = vadd.f32 %v86, %v580
  %v582 = vpop.f32.mrf.mxu0
  %583 = vmatprep.mubr.bf16.mxu0 0
  %584 = vmatmul.mubr.bf16.gmra.mxu0 %v331
  %v585 = vpop.f32.mrf.mxu0
  %v586 = vadd.f32 %v86, %v585
  %v587 = vpop.f32.mrf.mxu0
  %v588 = vpop.f32.mrf.mxu0
  %v589 = vadd.f32 %v86, %v588
  %v590 = vpop.f32.mrf.mxu0
  %591 = vmatprep.mubr.bf16.mxu0 0
  %592 = vmatmul.mubr.bf16.gmra.mxu0 %v334
  %v593 = vpop.f32.mrf.mxu0
  %v594 = vadd.f32 %v86, %v593
  %v595 = vpop.f32.mrf.mxu0
  %v596 = vpop.f32.mrf.mxu0
  %v597 = vadd.f32 %v86, %v596
  %v598 = vpop.f32.mrf.mxu0
  %599 = vmatprep.mubr.bf16.mxu0 0
  %600 = vmatmul.mubr.bf16.gmra.mxu0 %v337
  %v601 = vpop.f32.mrf.mxu0
  %v602 = vadd.f32 %v86, %v601
  %v603 = vpop.f32.mrf.mxu0
  %v604 = vpop.f32.mrf.mxu0
  %v605 = vadd.f32 %v86, %v604
  %v606 = vpop.f32.mrf.mxu0
  %607 = vmatprep.mubr.bf16.mxu0 0
  %608 = vmatmul.mubr.bf16.gmra.mxu0 %v340
  %v609 = vpop.f32.mrf.mxu0
  %v610 = vadd.f32 %v86, %v609
  %v611 = vpop.f32.mrf.mxu0
  %v612 = vpop.f32.mrf.mxu0
  %v613 = vadd.f32 %v86, %v612
  %v614 = vpop.f32.mrf.mxu0
  %615 = vmatprep.mubr.bf16.mxu0 0
  %616 = vmatmul.mubr.bf16.gmra.mxu0 %v343
  %v617 = vpop.f32.mrf.mxu0
  %v618 = vadd.f32 %v86, %v617
  %v619 = vpop.f32.mrf.mxu0
  %v620 = vpop.f32.mrf.mxu0
  %v621 = vadd.f32 %v86, %v620
  %v622 = vpop.f32.mrf.mxu0
  %623 = vmatprep.mubr.bf16.mxu0 0
  %624 = vmatmul.mubr.bf16.gmra.mxu0 %v346
  %v625 = vpop.f32.mrf.mxu0
  %v626 = vadd.f32 %v86, %v625
  %v627 = vpop.f32.mrf.mxu0
  %v628 = vpop.f32.mrf.mxu0
  %v629 = vadd.f32 %v86, %v628
  %v630 = vpop.f32.mrf.mxu0
  %631 = vmatprep.mubr.bf16.mxu0 0
  %632 = vmatmul.mubr.bf16.gmra.mxu0 %v349
  %v633 = vpop.f32.mrf.mxu0
  %v634 = vadd.f32 %v86, %v633
  %v635 = vpop.f32.mrf.mxu0
  %v636 = vpop.f32.mrf.mxu0
  %v637 = vadd.f32 %v86, %v636
  %v638 = vpop.f32.mrf.mxu0
  %639 = vdwg.mxu0
  %v640 = vmax.f32 %v386, 0.0
  %v641 = vmax.f32 %v389, 0.0
  %v642 = vmax.f32 %v394, 0.0
  %v643 = vmax.f32 %v397, 0.0
  %v644 = vmax.f32 %v402, 0.0
  %v645 = vmax.f32 %v405, 0.0
  %v646 = vmax.f32 %v410, 0.0
  %v647 = vmax.f32 %v413, 0.0
  %v648 = vmax.f32 %v418, 0.0
  %v649 = vmax.f32 %v421, 0.0
  %v650 = vmax.f32 %v426, 0.0
  %v651 = vmax.f32 %v429, 0.0
  %v652 = vmax.f32 %v434, 0.0
  %v653 = vmax.f32 %v437, 0.0
  %v654 = vmax.f32 %v442, 0.0
  %v655 = vmax.f32 %v445, 0.0
  %v656 = vmax.f32 %v450, 0.0
  %v657 = vmax.f32 %v453, 0.0
  %v658 = vmax.f32 %v458, 0.0
  %v659 = vmax.f32 %v461, 0.0
  %v660 = vmax.f32 %v466, 0.0
  %v661 = vmax.f32 %v469, 0.0
  %v662 = vmax.f32 %v474, 0.0
  %v663 = vmax.f32 %v477, 0.0
  %v664 = vmax.f32 %v482, 0.0
  %v665 = vmax.f32 %v485, 0.0
  %v666 = vmax.f32 %v490, 0.0
  %v667 = vmax.f32 %v493, 0.0
  %v668 = vmax.f32 %v498, 0.0
  %v669 = vmax.f32 %v501, 0.0
  %v670 = vmax.f32 %v506, 0.0
  %v671 = vmax.f32 %v509, 0.0
  %v672 = vmax.f32 %v514, 0.0
  %v673 = vmax.f32 %v517, 0.0
  %v674 = vmax.f32 %v522, 0.0
  %v675 = vmax.f32 %v525, 0.0
  %v676 = vmax.f32 %v530, 0.0
  %v677 = vmax.f32 %v533, 0.0
  %v678 = vmax.f32 %v538, 0.0
  %v679 = vmax.f32 %v541, 0.0
  %v680 = vmax.f32 %v546, 0.0
  %v681 = vmax.f32 %v549, 0.0
  %v682 = vmax.f32 %v554, 0.0
  %v683 = vmax.f32 %v557, 0.0
  %v684 = vmax.f32 %v562, 0.0
  %v685 = vmax.f32 %v565, 0.0
  %v686 = vmax.f32 %v570, 0.0
  %v687 = vmax.f32 %v573, 0.0
  %v688 = vmax.f32 %v578, 0.0
  %v689 = vmax.f32 %v581, 0.0
  %v690 = vmax.f32 %v586, 0.0
  %v691 = vmax.f32 %v589, 0.0
  %v692 = vmax.f32 %v594, 0.0
  %v693 = vmax.f32 %v597, 0.0
  %v694 = vmax.f32 %v602, 0.0
  %v695 = vmax.f32 %v605, 0.0
  %v696 = vmax.f32 %v610, 0.0
  %v697 = vmax.f32 %v613, 0.0
  %v698 = vmax.f32 %v618, 0.0
  %v699 = vmax.f32 %v621, 0.0
  %v700 = vmax.f32 %v626, 0.0
  %v701 = vmax.f32 %v629, 0.0
  %v702 = vmax.f32 %v634, 0.0
  %v703 = vmax.f32 %v637, 0.0
  %v704 = vpack.c.bf16 %v641, %v640
  %v705 = vpack.c.bf16 %v643, %v642
  %v706 = vpack.c.bf16 %v645, %v644
  %v707 = vpack.c.bf16 %v647, %v646
  %v708 = vpack.c.bf16 %v649, %v648
  %v709 = vpack.c.bf16 %v651, %v650
  %v710 = vpack.c.bf16 %v653, %v652
  %v711 = vpack.c.bf16 %v655, %v654
  %v712 = vpack.c.bf16 %v657, %v656
  %v713 = vpack.c.bf16 %v659, %v658
  %v714 = vpack.c.bf16 %v661, %v660
  %v715 = vpack.c.bf16 %v663, %v662
  %v716 = vpack.c.bf16 %v665, %v664
  %v717 = vpack.c.bf16 %v667, %v666
  %v718 = vpack.c.bf16 %v669, %v668
  %v719 = vpack.c.bf16 %v671, %v670
  %v720 = vpack.c.bf16 %v673, %v672
  %v721 = vpack.c.bf16 %v675, %v674
  %v722 = vpack.c.bf16 %v677, %v676
  %v723 = vpack.c.bf16 %v679, %v678
  %v724 = vpack.c.bf16 %v681, %v680
  %v725 = vpack.c.bf16 %v683, %v682
  %v726 = vpack.c.bf16 %v685, %v684
  %v727 = vpack.c.bf16 %v687, %v686
  %v728 = vpack.c.bf16 %v689, %v688
  %v729 = vpack.c.bf16 %v691, %v690
  %v730 = vpack.c.bf16 %v693, %v692
  %v731 = vpack.c.bf16 %v695, %v694
  %v732 = vpack.c.bf16 %v697, %v696
  %v733 = vpack.c.bf16 %v699, %v698
  %v734 = vpack.c.bf16 %v701, %v700
  %v735 = vpack.c.bf16 %v703, %v702
  %v768 = vunpack.c.l.b16 %v704
  %v769 = vunpack.c.h.b16 %v704
  %v770 = vunpack.c.l.b16 %v705
  %v771 = vunpack.c.h.b16 %v705
  %v772 = vunpack.c.l.b16 %v706
  %v773 = vunpack.c.h.b16 %v706
  %v774 = vunpack.c.l.b16 %v707
  %v775 = vunpack.c.h.b16 %v707
  %v776 = vunpack.c.l.b16 %v708
  %v777 = vunpack.c.h.b16 %v708
  %v778 = vunpack.c.l.b16 %v709
  %v779 = vunpack.c.h.b16 %v709
  %v780 = vunpack.c.l.b16 %v710
  %v781 = vunpack.c.h.b16 %v710
  %v782 = vunpack.c.l.b16 %v711
  %v783 = vunpack.c.h.b16 %v711
  %v784 = vunpack.c.l.b16 %v712
  %v785 = vunpack.c.h.b16 %v712
  %v786 = vunpack.c.l.b16 %v713
  %v787 = vunpack.c.h.b16 %v713
  %v788 = vunpack.c.l.b16 %v714
  %v789 = vunpack.c.h.b16 %v714
  %v790 = vunpack.c.l.b16 %v715
  %v791 = vunpack.c.h.b16 %v715
  %v792 = vunpack.c.l.b16 %v716
  %v793 = vunpack.c.h.b16 %v716
  %v794 = vunpack.c.l.b16 %v717
  %v795 = vunpack.c.h.b16 %v717
  %v796 = vunpack.c.l.b16 %v718
  %v797 = vunpack.c.h.b16 %v718
  %v798 = vunpack.c.l.b16 %v719
  %v799 = vunpack.c.h.b16 %v719
  %v800 = vunpack.c.l.b16 %v720
  %v801 = vunpack.c.h.b16 %v720
  %v802 = vunpack.c.l.b16 %v721
  %v803 = vunpack.c.h.b16 %v721
  %v804 = vunpack.c.l.b16 %v722
  %v805 = vunpack.c.h.b16 %v722
  %v806 = vunpack.c.l.b16 %v723
  %v807 = vunpack.c.h.b16 %v723
  %v808 = vunpack.c.l.b16 %v724
  %v809 = vunpack.c.h.b16 %v724
  %v810 = vunpack.c.l.b16 %v725
  %v811 = vunpack.c.h.b16 %v725
  %v812 = vunpack.c.l.b16 %v726
  %v813 = vunpack.c.h.b16 %v726
  %v814 = vunpack.c.l.b16 %v727
  %v815 = vunpack.c.h.b16 %v727
  %v816 = vunpack.c.l.b16 %v728
  %v817 = vunpack.c.h.b16 %v728
  %v818 = vunpack.c.l.b16 %v729
  %v819 = vunpack.c.h.b16 %v729
  %v820 = vunpack.c.l.b16 %v730
  %v821 = vunpack.c.h.b16 %v730
  %v822 = vunpack.c.l.b16 %v731
  %v823 = vunpack.c.h.b16 %v731
  %v824 = vunpack.c.l.b16 %v732
  %v825 = vunpack.c.h.b16 %v732
  %v826 = vunpack.c.l.b16 %v733
  %v827 = vunpack.c.h.b16 %v733
  %v828 = vunpack.c.l.b16 %v734
  %v829 = vunpack.c.h.b16 %v734
  %v830 = vunpack.c.l.b16 %v735
  %v831 = vunpack.c.h.b16 %v735
  %v832 = vpack.c.b16 %v768, %v768
  %v833 = vpack.c.b16 %v769, %v769
  %v834 = vpack.c.b16 %v770, %v770
  %v835 = vpack.c.b16 %v771, %v771
  %v836 = vpack.c.b16 %v772, %v772
  %v837 = vpack.c.b16 %v773, %v773
  %v838 = vpack.c.b16 %v774, %v774
  %v839 = vpack.c.b16 %v775, %v775
  %v840 = vpack.c.b16 %v776, %v776
  %v841 = vpack.c.b16 %v777, %v777
  %v842 = vpack.c.b16 %v778, %v778
  %v843 = vpack.c.b16 %v779, %v779
  %v844 = vpack.c.b16 %v780, %v780
  %v845 = vpack.c.b16 %v781, %v781
  %v846 = vpack.c.b16 %v782, %v782
  %v847 = vpack.c.b16 %v783, %v783
  %v848 = vpack.c.b16 %v784, %v784
  %v849 = vpack.c.b16 %v785, %v785
  %v850 = vpack.c.b16 %v786, %v786
  %v851 = vpack.c.b16 %v787, %v787
  %v852 = vpack.c.b16 %v788, %v788
  %v853 = vpack.c.b16 %v789, %v789
  %v854 = vpack.c.b16 %v790, %v790
  %v855 = vpack.c.b16 %v791, %v791
  %v856 = vpack.c.b16 %v792, %v792
  %v857 = vpack.c.b16 %v793, %v793
  %v858 = vpack.c.b16 %v794, %v794
  %v859 = vpack.c.b16 %v795, %v795
  %v860 = vpack.c.b16 %v796, %v796
  %v861 = vpack.c.b16 %v797, %v797
  %v862 = vpack.c.b16 %v798, %v798
  %v863 = vpack.c.b16 %v799, %v799
  %v864 = vpack.c.b16 %v800, %v800
  %v865 = vpack.c.b16 %v801, %v801
  %v866 = vpack.c.b16 %v802, %v802
  %v867 = vpack.c.b16 %v803, %v803
  %v868 = vpack.c.b16 %v804, %v804
  %v869 = vpack.c.b16 %v805, %v805
  %v870 = vpack.c.b16 %v806, %v806
  %v871 = vpack.c.b16 %v807, %v807
  %v872 = vpack.c.b16 %v808, %v808
  %v873 = vpack.c.b16 %v809, %v809
  %v874 = vpack.c.b16 %v810, %v810
  %v875 = vpack.c.b16 %v811, %v811
  %v876 = vpack.c.b16 %v812, %v812
  %v877 = vpack.c.b16 %v813, %v813
  %v878 = vpack.c.b16 %v814, %v814
  %v879 = vpack.c.b16 %v815, %v815
  %v880 = vpack.c.b16 %v816, %v816
  %v881 = vpack.c.b16 %v817, %v817
  %v882 = vpack.c.b16 %v818, %v818
  %v883 = vpack.c.b16 %v819, %v819
  %v884 = vpack.c.b16 %v820, %v820
  %v885 = vpack.c.b16 %v821, %v821
  %v886 = vpack.c.b16 %v822, %v822
  %v887 = vpack.c.b16 %v823, %v823
  %v888 = vpack.c.b16 %v824, %v824
  %v889 = vpack.c.b16 %v825, %v825
  %v890 = vpack.c.b16 %v826, %v826
  %v891 = vpack.c.b16 %v827, %v827
  %v892 = vpack.c.b16 %v828, %v828
  %v893 = vpack.c.b16 %v829, %v829
  %v894 = vpack.c.b16 %v830, %v830
  %v895 = vpack.c.b16 %v831, %v831
  %vm960 = vcmask 27648
  %961 = vst.msk [vmem:[%s3] sm:$0xf] %vm960, %v832
  %962 = vst.msk [vmem:[%s3 + $0x4] sm:$0xf] %vm960, %v833
  %963 = vst.msk [vmem:[%s3 + $0x8] sm:$0xf] %vm960, %v834
  %964 = vst.msk [vmem:[%s3 + $0xc] sm:$0xf] %vm960, %v835
  %965 = vst.msk [vmem:[%s3 + $0x10] sm:$0xf] %vm960, %v836
  %966 = vst.msk [vmem:[%s3 + $0x14] sm:$0xf] %vm960, %v837
  %967 = vst.msk [vmem:[%s3 + $0x18] sm:$0xf] %vm960, %v838
  %968 = vst.msk [vmem:[%s3 + $0x1c] sm:$0xf] %vm960, %v839
  %969 = vst.msk [vmem:[%s3 + $0x20] sm:$0xf] %vm960, %v840
  %970 = vst.msk [vmem:[%s3 + $0x24] sm:$0xf] %vm960, %v841
  %971 = vst.msk [vmem:[%s3 + $0x28] sm:$0xf] %vm960, %v842
  %972 = vst.msk [vmem:[%s3 + $0x2c] sm:$0xf] %vm960, %v843
  %973 = vst.msk [vmem:[%s3 + $0x30] sm:$0xf] %vm960, %v844
  %974 = vst.msk [vmem:[%s3 + $0x34] sm:$0xf] %vm960, %v845
  %975 = vst.msk [vmem:[%s3 + $0x38] sm:$0xf] %vm960, %v846
  %976 = vst.msk [vmem:[%s3 + $0x3c] sm:$0xf] %vm960, %v847
  %977 = vst.msk [vmem:[%s3 + $0x40] sm:$0xf] %vm960, %v848
  %978 = vst.msk [vmem:[%s3 + $0x44] sm:$0xf] %vm960, %v849
  %979 = vst.msk [vmem:[%s3 + $0x48] sm:$0xf] %vm960, %v850
  %980 = vst.msk [vmem:[%s3 + $0x4c] sm:$0xf] %vm960, %v851
  %981 = vst.msk [vmem:[%s3 + $0x50] sm:$0xf] %vm960, %v852
  %982 = vst.msk [vmem:[%s3 + $0x54] sm:$0xf] %vm960, %v853
  %983 = vst.msk [vmem:[%s3 + $0x58] sm:$0xf] %vm960, %v854
  %984 = vst.msk [vmem:[%s3 + $0x5c] sm:$0xf] %vm960, %v855
  %985 = vst.msk [vmem:[%s3 + $0x60] sm:$0xf] %vm960, %v856
  %986 = vst.msk [vmem:[%s3 + $0x64] sm:$0xf] %vm960, %v857
  %987 = vst.msk [vmem:[%s3 + $0x68] sm:$0xf] %vm960, %v858
  %988 = vst.msk [vmem:[%s3 + $0x6c] sm:$0xf] %vm960, %v859
  %989 = vst.msk [vmem:[%s3 + $0x70] sm:$0xf] %vm960, %v860
  %990 = vst.msk [vmem:[%s3 + $0x74] sm:$0xf] %vm960, %v861
  %991 = vst.msk [vmem:[%s3 + $0x78] sm:$0xf] %vm960, %v862
  %992 = vst.msk [vmem:[%s3 + $0x7c] sm:$0xf] %vm960, %v863
  %993 = vst.msk [vmem:[%s3 + $0x80] sm:$0xf] %vm960, %v864
  %994 = vst.msk [vmem:[%s3 + $0x84] sm:$0xf] %vm960, %v865
  %995 = vst.msk [vmem:[%s3 + $0x88] sm:$0xf] %vm960, %v866
  %996 = vst.msk [vmem:[%s3 + $0x8c] sm:$0xf] %vm960, %v867
  %997 = vst.msk [vmem:[%s3 + $0x90] sm:$0xf] %vm960, %v868
  %998 = vst.msk [vmem:[%s3 + $0x94] sm:$0xf] %vm960, %v869
  %999 = vst.msk [vmem:[%s3 + $0x98] sm:$0xf] %vm960, %v870
  %1000 = vst.msk [vmem:[%s3 + $0x9c] sm:$0xf] %vm960, %v871
  %1001 = vst.msk [vmem:[%s3 + $0xa0] sm:$0xf] %vm960, %v872
  %1002 = vst.msk [vmem:[%s3 + $0xa4] sm:$0xf] %vm960, %v873
  %1003 = vst.msk [vmem:[%s3 + $0xa8] sm:$0xf] %vm960, %v874
  %1004 = vst.msk [vmem:[%s3 + $0xac] sm:$0xf] %vm960, %v875
  %1005 = vst.msk [vmem:[%s3 + $0xb0] sm:$0xf] %vm960, %v876
  %1006 = vst.msk [vmem:[%s3 + $0xb4] sm:$0xf] %vm960, %v877
  %1007 = vst.msk [vmem:[%s3 + $0xb8] sm:$0xf] %vm960, %v878
  %1008 = vst.msk [vmem:[%s3 + $0xbc] sm:$0xf] %vm960, %v879
  %1009 = vst.msk [vmem:[%s3 + $0xc0] sm:$0xf] %vm960, %v880
  %1010 = vst.msk [vmem:[%s3 + $0xc4] sm:$0xf] %vm960, %v881
  %1011 = vst.msk [vmem:[%s3 + $0xc8] sm:$0xf] %vm960, %v882
  %1012 = vst.msk [vmem:[%s3 + $0xcc] sm:$0xf] %vm960, %v883
  %1013 = vst.msk [vmem:[%s3 + $0xd0] sm:$0xf] %vm960, %v884
  %1014 = vst.msk [vmem:[%s3 + $0xd4] sm:$0xf] %vm960, %v885
  %1015 = vst.msk [vmem:[%s3 + $0xd8] sm:$0xf] %vm960, %v886
  %1016 = vst.msk [vmem:[%s3 + $0xdc] sm:$0xf] %vm960, %v887
  %1017 = vst.msk [vmem:[%s3 + $0xe0] sm:$0xf] %vm960, %v888
  %1018 = vst.msk [vmem:[%s3 + $0xe4] sm:$0xf] %vm960, %v889
  %1019 = vst.msk [vmem:[%s3 + $0xe8] sm:$0xf] %vm960, %v890
  %1020 = vst.msk [vmem:[%s3 + $0xec] sm:$0xf] %vm960, %v891
  %1021 = vst.msk [vmem:[%s3 + $0xf0] sm:$0xf] %vm960, %v892
  %1022 = vst.msk [vmem:[%s3 + $0xf4] sm:$0xf] %vm960, %v893
  %1023 = vst.msk [vmem:[%s3 + $0xf8] sm:$0xf] %vm960, %v894
  %1024 = vst.msk [vmem:[%s3 + $0xfc] sm:$0xf] %vm960, %v895
  // Predicated region
  $region14: #{tpu_custom_call.1} parent=0 // pred_check
    _
  $region15: #{tpu_custom_call.1} parent=0 // pred_check_branch
    %1026 = sbr.rel (0) target = $region17
  $region16: #{tpu_custom_call.1} parent=0 // pred_region
    _
  $region17: #{tpu_custom_call.1} parent=0 // pred_fallthru
    _
  // Predicated region
  $region18: #{tpu_custom_call.1} parent=0 // pred_check
    _
  $region19: #{tpu_custom_call.1} parent=0 // pred_check_branch
    %1028 = sbr.rel (0) target = $region21
  $region20: #{tpu_custom_call.1} parent=0 // pred_region
    _
  $region21: #{tpu_custom_call.1} parent=0 // pred_fallthru
    _

</llo_original>
